<compile_context>
chip_gen: v5e
topology: v5e:2x2
jax: 0.10.0
libtpu: 0.0.40
codegen_flags: <defaults>
</compile_context>

<pallas_src>
import functools

import jax
import jax.numpy as jnp
from jax.experimental import pallas as pl
from jax.experimental.pallas import tpu as pltpu


def _mlp_kernel(x_ref, w1_ref, b1_ref, w2_ref, b2_ref, w3_ref, b3_ref, o_ref):
    # x_ref: (1, TM) f32, batch along lanes.
    x = x_ref[...]

    # Layer 1: Linear(1, 64) is a K=1 contraction -> pure VPU broadcast
    # multiply-add; ReLU fused on the VPU.
    h1 = jnp.maximum(w1_ref[...] * x + b1_ref[...], 0.0)            # (64, TM) f32

    # Layer 2: Linear(64, 64) on the MXU, bf16 operands, f32 accumulation;
    # bias add + ReLU in f32 on the VPU.
    h2 = jnp.dot(w2_ref[...], h1.astype(jnp.bfloat16),
                 preferred_element_type=jnp.float32) + b2_ref[...]   # (64, TM)
    h2 = jnp.maximum(h2, 0.0)

    # Layer 3: Linear(64, 2) on the MXU, bf16 operands, f32 accumulation.
    y = jnp.dot(w3_ref[...], h2.astype(jnp.bfloat16),
                preferred_element_type=jnp.float32) + b3_ref[...]    # (2, TM)

    o_ref[...] = y.astype(o_ref.dtype)


@functools.partial(jax.jit, static_argnames=("tile_m",))
def simple_dnn_forward(x, params, *, tile_m=2048):
    """x: (N, 1) float32.  Returns (N, 2) float32."""
    w1, b1, w2, b2, w3, b3 = params
    n = x.shape[0]

    # Effective batch tile: lane-aligned (multiple of 128), no bigger than the
    # (rounded-up) batch itself.  Batch is then zero-padded to a tile multiple.
    tm = min(int(tile_m), max(128, ((n + 127) // 128) * 128))
    tm = max(128, (tm // 128) * 128)
    n_pad = ((n + tm - 1) // tm) * tm
    grid = (n_pad // tm,)

    # Feature-major layout: batch maps to lanes. (n_pad, 1) -> (1, n_pad) is a
    # contiguous reshape, essentially free in XLA.
    xt = jnp.pad(x, ((0, n_pad - n), (0, 0))).T                      # (1, n_pad)

    # bf16 weights for the MXU matmuls (layer-1 weight / all biases stay f32).
    w2_bf = w2.astype(jnp.bfloat16)
    w3_bf = w3.astype(jnp.bfloat16)

    def resident(shape):
        # Small weights/biases: one full block, same block index every grid
        # step -> DMA'd once and resident in VMEM across the whole grid.
        return pl.BlockSpec(shape, lambda i: (0, 0))

    flops = n_pad * (2 * 1 * 64 + 2 * 64 * 64 + 2 * 64 * 2)
    bytes_accessed = (
        n_pad * (1 * 4 + 2 * 4)                      # x in, y out
        + 64 * 4 + 64 * 4                            # w1, b1
        + 64 * 64 * 2 + 64 * 4                       # w2 (bf16), b2
        + 2 * 64 * 2 + 2 * 4                         # w3 (bf16), b3
    )

    out_t = pl.pallas_call(
        _mlp_kernel,
        out_shape=jax.ShapeDtypeStruct((2, n_pad), jnp.float32),
        grid_spec=pltpu.PrefetchScalarGridSpec(
            num_scalar_prefetch=0,
            grid=grid,
            in_specs=[
                pl.BlockSpec((1, tm), lambda i: (0, i)),   # x   (1, n_pad)
                resident((64, 1)),                         # w1  (out, in)
                resident((64, 1)),                         # b1
                resident((64, 64)),                        # w2  (out, in) bf16
                resident((64, 1)),                         # b2
                resident((2, 64)),                         # w3  (out, in) bf16
                resident((2, 1)),                          # b3
            ],
            out_specs=pl.BlockSpec((2, tm), lambda i: (0, i)),
        ),
        compiler_params=pltpu.CompilerParams(
            dimension_semantics=("parallel",),
        ),
        cost_estimate=pl.CostEstimate(
            flops=flops, transcendentals=0, bytes_accessed=bytes_accessed),
    )(xt, w1, b1, w2_bf, b2, w3_bf, b3)

    return out_t.T[:n]                                               # (N, 2)


def init_params(key):
    """nn.Linear-style init: U(-1/sqrt(fan_in), 1/sqrt(fan_in)).

    Weights are stored PyTorch-style as (out_features, in_features); biases as
    (out_features, 1) column vectors (feature-major kernel layout)."""
    def linear(key, fan_in, fan_out):
        kw, kb = jax.random.split(key)
        bound = 1.0 / jnp.sqrt(jnp.asarray(fan_in, jnp.float32))
        w = jax.random.uniform(kw, (fan_out, fan_in), jnp.float32, -bound, bound)
        b = jax.random.uniform(kb, (fan_out, 1), jnp.float32, -bound, bound)
        return w, b

    k1, k2, k3 = jax.random.split(key, 3)
    w1, b1 = linear(k1, 1, 64)
    w2, b2 = linear(k2, 64, 64)
    w3, b3 = linear(k3, 64, 2)
    return (w1, b1, w2, b2, w3, b3)


def reference_forward(x, params):
    """Pure-JAX f32 reference matching PyTorch semantics (y = x @ W.T + b)."""
    w1, b1, w2, b2, w3, b3 = params
    h1 = jnp.maximum(x @ w1.T + b1.T, 0.0)
    h2 = jnp.maximum(h1 @ w2.T + b2.T, 0.0)
    return h2 @ w3.T + b3.T


if __name__ == "__main__":
    key = jax.random.PRNGKey(0)
    k_params, k_x = jax.random.split(key)

    params = init_params(k_params)
    x = jax.random.uniform(k_x, (8, 1), jnp.float32)   # (batch=8, in_features=1)

    out = jax.block_until_ready(simple_dnn_forward(x, params))
    ref = reference_forward(x, params)

    assert out.shape == (8, 2)
    # bf16 MXU matmuls (f32 accumulation) -> loosened tolerance vs f32 reference.
    assert jnp.allclose(out, ref, atol=2e-2, rtol=2e-2), "mismatch vs reference"

    print("KERNEL_OK")
</pallas_src>

<mosaic_0001>
module attributes {stable_mosaic.version = 11 : i64} {
  func.func @_mlp_kernel(%arg0: i32, %arg1: memref<1x128xf32, #tpu.memory_space<vmem>>, %arg2: memref<64x1xf32, #tpu.memory_space<vmem>>, %arg3: memref<64x1xf32, #tpu.memory_space<vmem>>, %arg4: memref<64x64xbf16, #tpu.memory_space<vmem>>, %arg5: memref<64x1xf32, #tpu.memory_space<vmem>>, %arg6: memref<2x64xbf16, #tpu.memory_space<vmem>>, %arg7: memref<2x1xf32, #tpu.memory_space<vmem>>, %arg8: memref<2x128xf32, #tpu.memory_space<vmem>>) attributes {dimension_semantics = [#tpu.dimension_semantics<parallel>], iteration_bounds = array<i64: 1>, scalar_prefetch = 0 : i64, scratch_operands = 0 : i64, tpu.core_type = #tpu.core_type<tc>, window_params = [{transform_indices = @transform_0, window_bounds = array<i64: 1, 128>}, {pipeline_mode = #tpu.pipeline_mode<synchronous>, transform_indices = @transform_1, window_bounds = array<i64: 64, 1>}, {pipeline_mode = #tpu.pipeline_mode<synchronous>, transform_indices = @transform_2, window_bounds = array<i64: 64, 1>}, {pipeline_mode = #tpu.pipeline_mode<synchronous>, transform_indices = @transform_3, window_bounds = array<i64: 64, 64>}, {pipeline_mode = #tpu.pipeline_mode<synchronous>, transform_indices = @transform_4, window_bounds = array<i64: 64, 1>}, {pipeline_mode = #tpu.pipeline_mode<synchronous>, transform_indices = @transform_5, window_bounds = array<i64: 2, 64>}, {pipeline_mode = #tpu.pipeline_mode<synchronous>, transform_indices = @transform_6, window_bounds = array<i64: 2, 1>}, {transform_indices = @transform_7, window_bounds = array<i64: 2, 128>}]} {
    %c0 = arith.constant 0 : index
    %c0_0 = arith.constant 0 : index
    %0 = vector.load %arg1[%c0, %c0_0] : memref<1x128xf32, #tpu.memory_space<vmem>>, vector<1x128xf32>
    %c0_1 = arith.constant 0 : index
    %c0_2 = arith.constant 0 : index
    %1 = vector.load %arg2[%c0_1, %c0_2] : memref<64x1xf32, #tpu.memory_space<vmem>>, vector<64x1xf32>
    %2 = vector.broadcast %1 : vector<64x1xf32> to vector<64x128xf32>
    %3 = vector.broadcast %0 : vector<1x128xf32> to vector<64x128xf32>
    %4 = arith.mulf %2, %3 : vector<64x128xf32>
    %c0_3 = arith.constant 0 : index
    %c0_4 = arith.constant 0 : index
    %5 = vector.load %arg3[%c0_3, %c0_4] : memref<64x1xf32, #tpu.memory_space<vmem>>, vector<64x1xf32>
    %6 = vector.broadcast %5 : vector<64x1xf32> to vector<64x128xf32>
    %7 = arith.addf %4, %6 : vector<64x128xf32>
    %cst = arith.constant 0.000000e+00 : f32
    %8 = vector.broadcast %cst : f32 to vector<64x128xf32>
    %9 = arith.maximumf %7, %8 : vector<64x128xf32>
    %c0_5 = arith.constant 0 : index
    %c0_6 = arith.constant 0 : index
    %10 = vector.load %arg4[%c0_5, %c0_6] : memref<64x64xbf16, #tpu.memory_space<vmem>>, vector<64x64xbf16>
    %11 = arith.truncf %9 : vector<64x128xf32> to vector<64x128xbf16>
    %cst_7 = arith.constant dense<0.000000e+00> : vector<64x128xf32>
    %12 = tpu.matmul %10, %11, %cst_7 {dimension_numbers = #tpu.dot_dimension_numbers<[1], [0], [0], [1], [0, 0, 1, 1], [], []>} : vector<64x64xbf16>, vector<64x128xbf16>, vector<64x128xf32> -> vector<64x128xf32>
    %c0_8 = arith.constant 0 : index
    %c0_9 = arith.constant 0 : index
    %13 = vector.load %arg5[%c0_8, %c0_9] : memref<64x1xf32, #tpu.memory_space<vmem>>, vector<64x1xf32>
    %14 = vector.broadcast %13 : vector<64x1xf32> to vector<64x128xf32>
    %15 = arith.addf %12, %14 : vector<64x128xf32>
    %cst_10 = arith.constant 0.000000e+00 : f32
    %16 = vector.broadcast %cst_10 : f32 to vector<64x128xf32>
    %17 = arith.maximumf %15, %16 : vector<64x128xf32>
    %c0_11 = arith.constant 0 : index
    %c0_12 = arith.constant 0 : index
    %18 = vector.load %arg6[%c0_11, %c0_12] : memref<2x64xbf16, #tpu.memory_space<vmem>>, vector<2x64xbf16>
    %19 = arith.truncf %17 : vector<64x128xf32> to vector<64x128xbf16>
    %cst_13 = arith.constant dense<0.000000e+00> : vector<2x128xf32>
    %20 = tpu.matmul %18, %19, %cst_13 {dimension_numbers = #tpu.dot_dimension_numbers<[1], [0], [0], [1], [0, 0, 1, 1], [], []>} : vector<2x64xbf16>, vector<64x128xbf16>, vector<2x128xf32> -> vector<2x128xf32>
    %c0_14 = arith.constant 0 : index
    %c0_15 = arith.constant 0 : index
    %21 = vector.load %arg7[%c0_14, %c0_15] : memref<2x1xf32, #tpu.memory_space<vmem>>, vector<2x1xf32>
    %22 = vector.broadcast %21 : vector<2x1xf32> to vector<2x128xf32>
    %23 = arith.addf %20, %22 : vector<2x128xf32>
    %c0_16 = arith.constant 0 : index
    %c0_17 = arith.constant 0 : index
    %24 = vector.load %arg8[%c0_16, %c0_17] : memref<2x128xf32, #tpu.memory_space<vmem>>, vector<2x128xf32>
    tpu.vector_store %arg8[%c0_16, %c0_17], %23 {strides = array<i32>} : memref<2x128xf32, #tpu.memory_space<vmem>>, vector<2x128xf32>,
    return
  }
  func.func @transform_0(%arg0: i32) -> (i32, i32) {
    %c0_i32 = arith.constant 0 : i32
    %c0_i32_0 = arith.constant 0 : i32
    return %c0_i32, %arg0 : i32, i32
  }
  func.func @transform_1(%arg0: i32) -> (i32, i32) {
    %c0_i32 = arith.constant 0 : i32
    %c0_i32_0 = arith.constant 0 : i32
    %c0_i32_1 = arith.constant 0 : i32
    return %c0_i32, %c0_i32_0 : i32, i32
  }
  func.func @transform_2(%arg0: i32) -> (i32, i32) {
    %c0_i32 = arith.constant 0 : i32
    %c0_i32_0 = arith.constant 0 : i32
    %c0_i32_1 = arith.constant 0 : i32
    return %c0_i32, %c0_i32_0 : i32, i32
  }
  func.func @transform_3(%arg0: i32) -> (i32, i32) {
    %c0_i32 = arith.constant 0 : i32
    %c0_i32_0 = arith.constant 0 : i32
    %c0_i32_1 = arith.constant 0 : i32
    return %c0_i32, %c0_i32_0 : i32, i32
  }
  func.func @transform_4(%arg0: i32) -> (i32, i32) {
    %c0_i32 = arith.constant 0 : i32
    %c0_i32_0 = arith.constant 0 : i32
    %c0_i32_1 = arith.constant 0 : i32
    return %c0_i32, %c0_i32_0 : i32, i32
  }
  func.func @transform_5(%arg0: i32) -> (i32, i32) {
    %c0_i32 = arith.constant 0 : i32
    %c0_i32_0 = arith.constant 0 : i32
    %c0_i32_1 = arith.constant 0 : i32
    return %c0_i32, %c0_i32_0 : i32, i32
  }
  func.func @transform_6(%arg0: i32) -> (i32, i32) {
    %c0_i32 = arith.constant 0 : i32
    %c0_i32_0 = arith.constant 0 : i32
    %c0_i32_1 = arith.constant 0 : i32
    return %c0_i32, %c0_i32_0 : i32, i32
  }
  func.func @transform_7(%arg0: i32) -> (i32, i32) {
    %c0_i32 = arith.constant 0 : i32
    %c0_i32_0 = arith.constant 0 : i32
    return %c0_i32, %arg0 : i32, i32
  }
}

</mosaic_0001>

<llo_original>
// kernel: simple_dnn_forward.1
$region0: #{simple_dnn_forward.1}
  #allocation0 [shape = 'u32[]', space=smem, size = 0x4, offset = 0x4, fixed_abs, tag = 'smem constant byte address 0x4 - core index']
  #allocation1 [shape = 'u32[72,128]{1,0:T(1,128)}', space=vmem, size = 0x9000, scoped, tag = 'internal scratch']
  %s0 = inlined_call_operand.vmem [shape: f32[1,128], index: 0, kind: input, shape index: {}]
  %s1 = inlined_call_operand.vmem [shape: f32[64,1], index: 1, kind: input, shape index: {}]
  %s2 = inlined_call_operand.vmem [shape: f32[64,1], index: 2, kind: input, shape index: {}]
  %s3 = inlined_call_operand.vmem [shape: bf16[64,64], index: 3, kind: input, shape index: {}]
  %s4 = inlined_call_operand.vmem [shape: f32[64,1], index: 4, kind: input, shape index: {}]
  %s5 = inlined_call_operand.vmem [shape: bf16[2,64], index: 5, kind: input, shape index: {}]
  %s6 = inlined_call_operand.vmem [shape: f32[2,1], index: 6, kind: input, shape index: {}]
  %s7 = inlined_call_operand.hbm [shape: f32[2,128], index: 7, kind: output, shape index: {}]
  %s8 = sld [smem:[#allocation0]]
  $region38: #{simple_dnn_forward.1} parent=0
    _
  %s10 = ssub.s32 1, %s8
  %s11 = scalar_select 0, %s10, %s8
  $region1: #{simple_dnn_forward.1} parent=0
    #allocation2 [shape = 'u8[1024]{0}', space=vmem, size = 0x400, scoped, tag = 'output window, operand 0, single buffered']
    #allocation3 [shape = 's32[1]{0}', space=sflag, size = 0x4, scoped, tag = 'scoped memory for simple_dnn_forward.1']
    %12 = vsyncpa [#allocation3], 0
    // Predicated region
    $region2: #{simple_dnn_forward.1} parent=1 // pred_check
      _
    $region3: #{simple_dnn_forward.1} parent=1 // pred_check_branch
      %14 = sbr.rel (0) target = $region5
    $region4: #{simple_dnn_forward.1} parent=1 // pred_region
      _
    $region5: #{simple_dnn_forward.1} parent=1 // pred_fallthru
      _
    // Predicated region
    $region6: #{simple_dnn_forward.1} parent=1 // pred_check
      _
    $region7: #{simple_dnn_forward.1} parent=1 // pred_check_branch
      %16 = sbr.rel (0) target = $region9
    $region8: #{simple_dnn_forward.1} parent=1 // pred_region
      _
    $region9: #{simple_dnn_forward.1} parent=1 // pred_fallthru
      _
    // Predicated region
    $region10: #{simple_dnn_forward.1} parent=1 // pred_check
      _
    $region11: #{simple_dnn_forward.1} parent=1 // pred_check_branch
      %18 = sbr.rel (0) target = $region13
    $region12: #{simple_dnn_forward.1} parent=1 // pred_region
      _
    $region13: #{simple_dnn_forward.1} parent=1 // pred_fallthru
      _
    // Predicated region
    $region14: #{simple_dnn_forward.1} parent=1 // pred_check
      _
    $region15: #{simple_dnn_forward.1} parent=1 // pred_check_branch
      %20 = sbr.rel (0) target = $region17
    $region16: #{simple_dnn_forward.1} parent=1 // pred_region
      _
    $region17: #{simple_dnn_forward.1} parent=1 // pred_fallthru
      _
    // Predicated region
    $region18: #{simple_dnn_forward.1} parent=1 // pred_check
      _
    $region19: #{simple_dnn_forward.1} parent=1 // pred_check_branch
      %22 = sbr.rel (0) target = $region21
    $region20: #{simple_dnn_forward.1} parent=1 // pred_region
      _
    $region21: #{simple_dnn_forward.1} parent=1 // pred_fallthru
      _
    // Predicated region
    $region22: #{simple_dnn_forward.1} parent=1 // pred_check
      _
    $region23: #{simple_dnn_forward.1} parent=1 // pred_check_branch
      %24 = sbr.rel (0) target = $region25
    $region24: #{simple_dnn_forward.1} parent=1 // pred_region
      _
    $region25: #{simple_dnn_forward.1} parent=1 // pred_fallthru
      _
    // Predicated region
    $region26: #{simple_dnn_forward.1} parent=1 // pred_check
      _
    $region27: #{simple_dnn_forward.1} parent=1 // pred_check_branch
      %26 = sbr.rel (0) target = $region29
    $region28: #{simple_dnn_forward.1} parent=1 // pred_region
      _
    $region29: #{simple_dnn_forward.1} parent=1 // pred_fallthru
      _
    %v28 = vld [vmem:[%s0] sm:$0x1]
    %v29 = vld [vmem:[%s1] sm:$0xff]
    %v30 = vld [vmem:[%s1 + $0x8] sm:$0xff]
    %v31 = vld [vmem:[%s1 + $0x10] sm:$0xff]
    %v32 = vld [vmem:[%s1 + $0x18] sm:$0xff]
    %v33 = vld [vmem:[%s1 + $0x20] sm:$0xff]
    %v34 = vld [vmem:[%s1 + $0x28] sm:$0xff]
    %v35 = vld [vmem:[%s1 + $0x30] sm:$0xff]
    %v36 = vld [vmem:[%s1 + $0x38] sm:$0xff]
    %38 = vset.pattern.permute.xlu0 0
    %39 = vperm.xlu0 %38, %v29
    %v40 = vpop.permute.xlu0 %39
    %43 = vset.pattern.permute.xlu0 0
    %44 = vperm.xlu0 %43, %v30
    %v45 = vpop.permute.xlu0 %44
    %48 = vset.pattern.permute.xlu0 0
    %49 = vperm.xlu0 %48, %v31
    %v50 = vpop.permute.xlu0 %49
    %53 = vset.pattern.permute.xlu0 0
    %54 = vperm.xlu0 %53, %v32
    %v55 = vpop.permute.xlu0 %54
    %58 = vset.pattern.permute.xlu0 0
    %59 = vperm.xlu0 %58, %v33
    %v60 = vpop.permute.xlu0 %59
    %63 = vset.pattern.permute.xlu0 0
    %64 = vperm.xlu0 %63, %v34
    %v65 = vpop.permute.xlu0 %64
    %68 = vset.pattern.permute.xlu0 0
    %69 = vperm.xlu0 %68, %v35
    %v70 = vpop.permute.xlu0 %69
    %73 = vset.pattern.permute.xlu0 0
    %74 = vperm.xlu0 %73, %v36
    %v75 = vpop.permute.xlu0 %74
    %v78 = vperm.slane %v28, 0
    %v80 = vmul.f32 %v40, %v78
    %v81 = vmul.f32 %v45, %v78
    %v82 = vmul.f32 %v50, %v78
    %v83 = vmul.f32 %v55, %v78
    %v84 = vmul.f32 %v60, %v78
    %v85 = vmul.f32 %v65, %v78
    %v86 = vmul.f32 %v70, %v78
    %v87 = vmul.f32 %v75, %v78
    %v88 = vld [vmem:[%s2] sm:$0xff]
    %v89 = vld [vmem:[%s2 + $0x8] sm:$0xff]
    %v90 = vld [vmem:[%s2 + $0x10] sm:$0xff]
    %v91 = vld [vmem:[%s2 + $0x18] sm:$0xff]
    %v92 = vld [vmem:[%s2 + $0x20] sm:$0xff]
    %v93 = vld [vmem:[%s2 + $0x28] sm:$0xff]
    %v94 = vld [vmem:[%s2 + $0x30] sm:$0xff]
    %v95 = vld [vmem:[%s2 + $0x38] sm:$0xff]
    %97 = vset.pattern.permute.xlu0 0
    %98 = vperm.xlu0 %97, %v88
    %v99 = vpop.permute.xlu0 %98
    %102 = vset.pattern.permute.xlu0 0
    %103 = vperm.xlu0 %102, %v89
    %v104 = vpop.permute.xlu0 %103
    %107 = vset.pattern.permute.xlu0 0
    %108 = vperm.xlu0 %107, %v90
    %v109 = vpop.permute.xlu0 %108
    %112 = vset.pattern.permute.xlu0 0
    %113 = vperm.xlu0 %112, %v91
    %v114 = vpop.permute.xlu0 %113
    %117 = vset.pattern.permute.xlu0 0
    %118 = vperm.xlu0 %117, %v92
    %v119 = vpop.permute.xlu0 %118
    %122 = vset.pattern.permute.xlu0 0
    %123 = vperm.xlu0 %122, %v93
    %v124 = vpop.permute.xlu0 %123
    %127 = vset.pattern.permute.xlu0 0
    %128 = vperm.xlu0 %127, %v94
    %v129 = vpop.permute.xlu0 %128
    %132 = vset.pattern.permute.xlu0 0
    %133 = vperm.xlu0 %132, %v95
    %v134 = vpop.permute.xlu0 %133
    %v136 = vadd.f32 %v80, %v99
    %v137 = vadd.f32 %v81, %v104
    %v138 = vadd.f32 %v82, %v109
    %v139 = vadd.f32 %v83, %v114
    %v140 = vadd.f32 %v84, %v119
    %v141 = vadd.f32 %v85, %v124
    %v142 = vadd.f32 %v86, %v129
    %v143 = vadd.f32 %v87, %v134
    %v144 = vmax.f32 %v136, 0.0
    %v145 = vmax.f32 %v137, 0.0
    %v146 = vmax.f32 %v138, 0.0
    %v147 = vmax.f32 %v139, 0.0
    %v148 = vmax.f32 %v140, 0.0
    %v149 = vmax.f32 %v141, 0.0
    %v150 = vmax.f32 %v142, 0.0
    %v151 = vmax.f32 %v143, 0.0
    %v152 = vld [vmem:[%s3] sm:$0xf]
    %v153 = vld [vmem:[%s3 + $0x4] sm:$0xf]
    %v154 = vld [vmem:[%s3 + $0x8] sm:$0xf]
    %v155 = vld [vmem:[%s3 + $0xc] sm:$0xf]
    %v156 = vld [vmem:[%s3 + $0x10] sm:$0xf]
    %v157 = vld [vmem:[%s3 + $0x14] sm:$0xf]
    %v158 = vld [vmem:[%s3 + $0x18] sm:$0xf]
    %v159 = vld [vmem:[%s3 + $0x1c] sm:$0xf]
    %v160 = vpack.c.bf16 %v145, %v144
    %v161 = vpack.c.bf16 %v147, %v146
    %v162 = vpack.c.bf16 %v149, %v148
    %v163 = vpack.c.bf16 %v151, %v150
    %v164 = vld [vmem:[%s4] sm:$0xff]
    %v165 = vld [vmem:[%s4 + $0x8] sm:$0xff]
    %v166 = vld [vmem:[%s4 + $0x10] sm:$0xff]
    %v167 = vld [vmem:[%s4 + $0x18] sm:$0xff]
    %v168 = vld [vmem:[%s4 + $0x20] sm:$0xff]
    %v169 = vld [vmem:[%s4 + $0x28] sm:$0xff]
    %v170 = vld [vmem:[%s4 + $0x30] sm:$0xff]
    %v171 = vld [vmem:[%s4 + $0x38] sm:$0xff]
    %173 = vset.pattern.permute.xlu0 0
    %174 = vperm.xlu0 %173, %v164
    %v175 = vpop.permute.xlu0 %174
    %178 = vset.pattern.permute.xlu0 0
    %179 = vperm.xlu0 %178, %v165
    %v180 = vpop.permute.xlu0 %179
    %183 = vset.pattern.permute.xlu0 0
    %184 = vperm.xlu0 %183, %v166
    %v185 = vpop.permute.xlu0 %184
    %188 = vset.pattern.permute.xlu0 0
    %189 = vperm.xlu0 %188, %v167
    %v190 = vpop.permute.xlu0 %189
    %193 = vset.pattern.permute.xlu0 0
    %194 = vperm.xlu0 %193, %v168
    %v195 = vpop.permute.xlu0 %194
    %198 = vset.pattern.permute.xlu0 0
    %199 = vperm.xlu0 %198, %v169
    %v200 = vpop.permute.xlu0 %199
    %203 = vset.pattern.permute.xlu0 0
    %204 = vperm.xlu0 %203, %v170
    %v205 = vpop.permute.xlu0 %204
    %208 = vset.pattern.permute.xlu0 0
    %209 = vperm.xlu0 %208, %v171
    %v210 = vpop.permute.xlu0 %209
    %v220 = vunpack.c.l.b16 %v152
    %v221 = vunpack.c.l.b16 %v153
    %v222 = vunpack.c.l.b16 %v154
    %v223 = vunpack.c.l.b16 %v155
    %v224 = vunpack.c.l.b16 %v156
    %v225 = vunpack.c.l.b16 %v157
    %v226 = vunpack.c.l.b16 %v158
    %v227 = vunpack.c.l.b16 %v159
    %v228 = vpack.c.b16 %v221, %v220
    %v229 = vpack.c.b16 %v223, %v222
    %v230 = vpack.c.b16 %v225, %v224
    %v231 = vpack.c.b16 %v227, %v226
    %vm232 = vcmask 523264
    %v234 = vsel %vm232, %v228, 0
    %v237 = vsel %vm232, %v229, 0
    %v240 = vsel %vm232, %v230, 0
    %v243 = vsel %vm232, %v231, 0
    %245 = vmatpush.bf16.msra.mxu0 0
    %246 = vmatpush.bf16.msra.mxu0 0
    %247 = vmatpush.bf16.msra.mxu0 0
    %248 = vmatpush.bf16.msra.mxu0 0
    %249 = vmatpush.bf16.msra.mxu0 %v163
    %250 = vmatpush.bf16.msra.mxu0 %v162
    %251 = vmatpush.bf16.msra.mxu0 %v161
    %252 = vmatpush.bf16.msra.mxu0 %v160
    %253 = vmatmul.bf16.gmra.mxu0 %v234
    %v254 = vpop.f32.mrf.mxu0
    %v255 = vadd.f32 %v175, %v254
    %v256 = vpop.f32.mrf.mxu0
    %v257 = vadd.f32 %v180, %v256
    %258 = vmatmul.bf16.gmra.mxu0 %v237
    %v259 = vpop.f32.mrf.mxu0
    %v260 = vadd.f32 %v185, %v259
    %v261 = vpop.f32.mrf.mxu0
    %v262 = vadd.f32 %v190, %v261
    %263 = vmatmul.bf16.gmra.mxu0 %v240
    %v264 = vpop.f32.mrf.mxu0
    %v265 = vadd.f32 %v195, %v264
    %v266 = vpop.f32.mrf.mxu0
    %v267 = vadd.f32 %v200, %v266
    %268 = vmatmul.bf16.gmra.mxu0 %v243
    %v269 = vpop.f32.mrf.mxu0
    %v270 = vadd.f32 %v205, %v269
    %v271 = vpop.f32.mrf.mxu0
    %v272 = vadd.f32 %v210, %v271
    %273 = vdwg.mxu0
    %v274 = vmax.f32 %v255, 0.0
    %v275 = vmax.f32 %v257, 0.0
    %v276 = vmax.f32 %v260, 0.0
    %v277 = vmax.f32 %v262, 0.0
    %v278 = vmax.f32 %v265, 0.0
    %v279 = vmax.f32 %v267, 0.0
    %v280 = vmax.f32 %v270, 0.0
    %v281 = vmax.f32 %v272, 0.0
    %v282 = vld [vmem:[%s5] sm:$0x1]
    %v283 = vpack.c.bf16 %v275, %v274
    %v284 = vpack.c.bf16 %v277, %v276
    %v285 = vpack.c.bf16 %v279, %v278
    %v286 = vpack.c.bf16 %v281, %v280
    %v287 = vld [vmem:[%s6] sm:$0x3]
    %289 = vset.pattern.permute.xlu0 0
    %290 = vperm.xlu0 %289, %v287
    %v291 = vpop.permute.xlu0 %290
    %v294 = vsel %vm232, %v282, 0
    %296 = vmatpush.bf16.msra.mxu0 0
    %297 = vmatpush.bf16.msra.mxu0 0
    %298 = vmatpush.bf16.msra.mxu0 0
    %299 = vmatpush.bf16.msra.mxu0 0
    %300 = vmatpush.bf16.msra.mxu0 %v286
    %301 = vmatpush.bf16.msra.mxu0 %v285
    %302 = vmatpush.bf16.msra.mxu0 %v284
    %303 = vmatpush.bf16.msra.mxu0 %v283
    %304 = vmatmul.bf16.gmra.mxu0 %v294
    %v305 = vpop.f32.mrf.mxu0
    %v306 = vadd.f32 %v291, %v305
    %v307 = vpop.f32.mrf.mxu0
    %308 = vdwg.mxu0
    %309 = vst [vmem:[#allocation2] sm:$0x3] %v306
    // Predicated region
    $region30: #{simple_dnn_forward.1} parent=1 // pred_check
      _
    $region31: #{simple_dnn_forward.1} parent=1 // pred_check_branch
      %311 = sbr.rel (0) target = $region33
    $region32: #{simple_dnn_forward.1} parent=1 // pred_region
      %313 = vsyncadd [#allocation3], 0
      %s315 = sshll.u32 [#allocation2], 4
      %s316 = int_to_ptr.vmem [resolvable:$true] %s315
      %s317 = sshll.u32 %s7, 4
      %s318 = int_to_ptr.hbm [resolvable:$true] %s317
      %320 = dma.vmem_to_hbm [thread:$0]  %s316, 32, %s318, [#allocation3]
    $region33: #{simple_dnn_forward.1} parent=1 // pred_fallthru
      _
    // Predicated region
    $region34: #{simple_dnn_forward.1} parent=1 // pred_check
      _
    $region35: #{simple_dnn_forward.1} parent=1 // pred_check_branch
      %322 = sbr.rel (0) target = $region37
    $region36: #{simple_dnn_forward.1} parent=1 // pred_region
      %324 = dma.done [#allocation3], 32
    $region37: #{simple_dnn_forward.1} parent=1 // pred_fallthru
      _
    %325 = vsyncpa [#allocation3], 1

</llo_original>
